<compile_context>
chip_gen: v5e
topology: v5e:2x2
jax: 0.10.0
libtpu: 0.0.40
codegen_flags: <defaults>
</compile_context>

<pallas_src>
import functools
import math

import jax
import jax.numpy as jnp
from jax.experimental import pallas as pl
from jax.experimental.pallas import tpu as pltpu

LN_EPS = 1e-12
_INV_SQRT2 = 1.0 / math.sqrt(2.0)


def _round_up(x, m):
    return (x + m - 1) // m * m


# ----------------------------- hardware sizing ----------------------------------
@functools.lru_cache(maxsize=None)
def _vmem_cap_bytes():
    try:
        info = pltpu.get_tpu_info()
        return int(getattr(info, "vmem_capacity_bytes", 128 << 20))
    except Exception:
        return 128 << 20


def _vmem_limit_bytes():
    # ~96 MiB scoped on v5e/v6e (128 MiB physical), ~48 MiB on v7x (64 MiB).
    cap = _vmem_cap_bytes()
    return int(min(cap * 3 // 4, 100 << 20))


def _target_rows():
    # Bigger row tiles divide weight-restream HBM traffic; smaller on v7x's VMEM.
    return 512 if _vmem_cap_bytes() <= (64 << 20) else 1024


def _mosaic_params(dimension_semantics):
    return pltpu.CompilerParams(dimension_semantics=dimension_semantics,
                                vmem_limit_bytes=_vmem_limit_bytes())


_HAS_BUFFERED = hasattr(pl, "Buffered")


def _bspec(shape, index_map, *, single_buffer=False):
    """BlockSpec; constant-index parameter blocks are single-buffered to halve
    their VMEM footprint (they never change across the grid)."""
    if single_buffer and _HAS_BUFFERED:
        try:
            return pl.BlockSpec(shape, index_map, pipeline_mode=pl.Buffered(1))
        except TypeError:
            pass
    return pl.BlockSpec(shape, index_map)


# ----------------------------- erf / gelu (f32) --------------------------------
def _erf_f32(x):
    # Rational erfc approximation (|abs err| < 1.2e-7): matches the exact
    # torch.erf-based GELU to float32 precision and lowers cleanly on Mosaic
    # (single exp -> EUP slot).
    ax = jnp.abs(x)
    t = 1.0 / (1.0 + 0.5 * ax)
    poly = -1.26551223 + t * (1.00002368 + t * (0.37409196 + t * (0.09678418 +
           t * (-0.18628806 + t * (0.27886807 + t * (-1.13520398 + t * (1.48851587 +
           t * (-0.82215223 + t * 0.17087277))))))))
    erfc = t * jnp.exp(-ax * ax + poly)
    return jnp.where(x >= 0, 1.0 - erfc, erfc - 1.0)


def _gelu_f32(x):
    # exact (erf-based) GELU, matching the PyTorch reference gelu()
    return x * 0.5 * (1.0 + _erf_f32(x * _INV_SQRT2))


# ------------------------------- kernels ----------------------------------------
def _ln_linear_kernel(x_ref, g_ref, bt_ref, w_ref, b_ref, y_ref, xn_ref, xn_sc):
    # TF-style LayerNorm prologue (f32), computed ONCE per row tile (j == 0) and
    # stashed in a VMEM scratch that persists across the N-tile axis.  The
    # normalized activations are also emitted for the residual path.
    @pl.when(pl.program_id(1) == 0)
    def _():
        x = x_ref[...].astype(jnp.float32)
        u = jnp.mean(x, axis=-1, keepdims=True)
        xc = x - u
        var = jnp.mean(xc * xc, axis=-1, keepdims=True)
        xn = g_ref[...] * (xc * jax.lax.rsqrt(var + LN_EPS)) + bt_ref[...]
        xn_bf = xn.astype(jnp.bfloat16)
        xn_sc[...] = xn_bf
        xn_ref[...] = xn_bf

    y = jnp.dot(xn_sc[...], w_ref[...], preferred_element_type=jnp.float32) + b_ref[...]
    y_ref[...] = y.astype(y_ref.dtype)


def _linear_kernel(x_ref, w_ref, b_ref, o_ref, *, act):
    y = jnp.dot(x_ref[...], w_ref[...], preferred_element_type=jnp.float32) + b_ref[...]
    if act == "gelu":
        y = _gelu_f32(y)
    o_ref[...] = y.astype(o_ref.dtype)


def _linear_res_ln_kernel(x_ref, w_ref, b_ref, res_ref, g_ref, bt_ref, o_ref, acc_ref):
    # K-tiled dense(x): f32 accumulation in a VMEM scratch; on the last K step
    # add bias + residual and apply the TF-style LayerNorm (eps inside sqrt).
    k = pl.program_id(1)

    @pl.when(k == 0)
    def _():
        acc_ref[...] = jnp.zeros_like(acc_ref)

    acc_ref[...] += jnp.dot(x_ref[...], w_ref[...], preferred_element_type=jnp.float32)

    @pl.when(k == pl.num_programs(1) - 1)
    def _():
        y = acc_ref[...] + b_ref[...] + res_ref[...].astype(jnp.float32)
        u = jnp.mean(y, axis=-1, keepdims=True)
        yc = y - u
        var = jnp.mean(yc * yc, axis=-1, keepdims=True)
        o_ref[...] = (g_ref[...] * (yc * jax.lax.rsqrt(var + LN_EPS))
                      + bt_ref[...]).astype(o_ref.dtype)


def _attention_kernel(qkv_ref, o_ref, ctx_sc, *, num_heads, head_dim):
    # One batch row per grid step, all heads handled inside.  qkv is HEAD-MAJOR
    # ([q_h | k_h | v_h] per head, contiguous 3*d-wide lane range per head) and
    # the 1/sqrt(d) scale is already folded into q.
    # TODO(synk): replace the full (S, S) softmax with a KV-blocked online
    # softmax (flash-style) for long sequences.
    qkv = qkv_ref[0]                                      # (S, 3H) bf16
    for h in range(num_heads):
        base = 3 * head_dim * h
        q = qkv[:, base:base + head_dim]
        k = qkv[:, base + head_dim:base + 2 * head_dim]
        v = qkv[:, base + 2 * head_dim:base + 3 * head_dim]
        # contract on the head_dim axis of both operands -> no materialized k.T
        s = jax.lax.dot_general(q, k, (((1,), (1,)), ((), ())),
                                preferred_element_type=jnp.float32)     # (S, S)
        m = jnp.max(s, axis=-1, keepdims=True)
        p = jnp.exp(s - m)
        inv = pl.reciprocal(jnp.sum(p, axis=-1, keepdims=True), approx=True)
        probs = (p * inv).astype(jnp.bfloat16)
        # write this head's context at its lane offset: bounds live ranges and
        # keeps the final store one unmasked lane-dense (S, H) slab.
        ctx_sc[:, head_dim * h:head_dim * (h + 1)] = jnp.dot(
            probs, v, preferred_element_type=jnp.float32)
    o_ref[0] = ctx_sc[...].astype(o_ref.dtype)


# ------------------------------- tiling helpers ---------------------------------
def _plan_rows(B, S, target_rows):
    """Return (B_pad, tm): rows-per-tile is a whole number of batch rows so the
    flattened [B_pad*S, *] activations reshape to [B_pad, S, *] without copies.
    Prefers a row tile that is a multiple of 256 (fills the 256x256 MXU on
    v6e/v7x); always a multiple of 8 (sublane)."""
    c = max(1, target_rows // S)
    for align in (256, 8):
        step = align // math.gcd(S, align)
        ca = _round_up(c, step)
        if ca * S <= 2 * target_rows or align == 8:
            c = ca
            break
    if c >= B:
        return B, B * S               # single row tile == full dim (always legal)
    return _round_up(B, c), c * S


def _choose_tile_n(N, target=512):
    if N <= target:
        return N
    for tn in (512, 256, 128):
        if N % tn == 0:
            return tn
    # TODO(synk): pad the weight's N to a 128-multiple at param-prep time (and
    # slice the output) instead of falling back to an untiled block.
    return N


def _choose_tile_k(K, target=512):
    if K <= target:
        return K
    for tk in (512, 256, 128):
        if K % tk == 0:
            return tk
    return K


# ------------------------------- wrappers ----------------------------------------
def ln_linear(x, gamma, beta, w, b, *, tm):
    """y = LayerNorm(x) @ w + b; also returns LN(x) (bf16) for the residual path."""
    M, K = x.shape
    N = w.shape[1]
    tn = _choose_tile_n(N)
    return pl.pallas_call(
        _ln_linear_kernel,
        out_shape=(jax.ShapeDtypeStruct((M, N), jnp.bfloat16),
                   jax.ShapeDtypeStruct((M, K), jnp.bfloat16)),
        grid=(M // tm, N // tn),
        in_specs=[
            pl.BlockSpec((tm, K), lambda i, j: (i, 0)),
            _bspec((1, K), lambda i, j: (0, 0), single_buffer=True),
            _bspec((1, K), lambda i, j: (0, 0), single_buffer=True),
            pl.BlockSpec((K, tn), lambda i, j: (0, j)),
            pl.BlockSpec((1, tn), lambda i, j: (0, j)),
        ],
        out_specs=[
            pl.BlockSpec((tm, tn), lambda i, j: (i, j)),
            pl.BlockSpec((tm, K), lambda i, j: (i, 0)),
        ],
        scratch_shapes=[pltpu.VMEM((tm, K), jnp.bfloat16)],
        compiler_params=_mosaic_params(("parallel", "arbitrary")),
    )(x, gamma.reshape(1, K), beta.reshape(1, K), w, b.reshape(1, N))


def linear(x, w, b, *, tm, act=None, out_dtype=jnp.bfloat16):
    M, K = x.shape
    N = w.shape[1]
    tn = _choose_tile_n(N)
    return pl.pallas_call(
        functools.partial(_linear_kernel, act=act),
        out_shape=jax.ShapeDtypeStruct((M, N), out_dtype),
        grid=(M // tm, N // tn),
        in_specs=[
            pl.BlockSpec((tm, K), lambda i, j: (i, 0)),
            pl.BlockSpec((K, tn), lambda i, j: (0, j)),
            pl.BlockSpec((1, tn), lambda i, j: (0, j)),
        ],
        out_specs=pl.BlockSpec((tm, tn), lambda i, j: (i, j)),
        compiler_params=_mosaic_params(("parallel", "parallel")),
    )(x, w, b.reshape(1, N))


def linear_res_ln(x, w, b, res, gamma, beta, *, tm, out_dtype=jnp.bfloat16):
    """LayerNorm(x @ w + b + res), with the contraction (K) axis grid-tiled."""
    M, K = x.shape
    N = w.shape[1]
    tk = _choose_tile_k(K)
    return pl.pallas_call(
        _linear_res_ln_kernel,
        out_shape=jax.ShapeDtypeStruct((M, N), out_dtype),
        grid=(M // tm, K // tk),
        in_specs=[
            pl.BlockSpec((tm, tk), lambda i, k: (i, k)),
            pl.BlockSpec((tk, N), lambda i, k: (k, 0)),
            _bspec((1, N), lambda i, k: (0, 0), single_buffer=True),
            pl.BlockSpec((tm, N), lambda i, k: (i, 0)),
            _bspec((1, N), lambda i, k: (0, 0), single_buffer=True),
            _bspec((1, N), lambda i, k: (0, 0), single_buffer=True),
        ],
        out_specs=pl.BlockSpec((tm, N), lambda i, k: (i, 0)),
        scratch_shapes=[pltpu.VMEM((tm, N), jnp.float32)],
        compiler_params=_mosaic_params(("parallel", "arbitrary")),
    )(x, w, b.reshape(1, N), res, gamma.reshape(1, N), beta.reshape(1, N))


def attention(qkv_bsh, *, num_heads, head_dim):
    Bp, S, threeH = qkv_bsh.shape
    H = threeH // 3
    kern = functools.partial(_attention_kernel, num_heads=num_heads, head_dim=head_dim)
    return pl.pallas_call(
        kern,
        out_shape=jax.ShapeDtypeStruct((Bp, S, H), jnp.bfloat16),
        grid=(Bp,),
        in_specs=[pl.BlockSpec((1, S, threeH), lambda b: (b, 0, 0))],
        out_specs=pl.BlockSpec((1, S, H), lambda b: (b, 0, 0)),
        scratch_shapes=[pltpu.VMEM((S, H), jnp.float32)],
        compiler_params=_mosaic_params(("parallel",)),
    )(qkv_bsh)


# ------------------------------- model --------------------------------------------
def init_params(key, hidden_size, num_heads, intermediate_factor=4, num_layers=2):
    H = hidden_size
    I = intermediate_factor * H
    d = H // num_heads
    scale = 1.0 / math.sqrt(d)

    def lin(k, fan_in, fan_out):
        k1, k2 = jax.random.split(k)
        lim = 1.0 / math.sqrt(fan_in)
        w = jax.random.uniform(k1, (fan_in, fan_out), jnp.float32, -lim, lim)  # (in,out)=W.T
        b = jax.random.uniform(k2, (fan_out,), jnp.float32, -lim, lim)
        return w, b

    keys = jax.random.split(key, num_layers)
    params = {
        "num_heads": num_heads,
        "emb_ln_g": jnp.ones((H,), jnp.float32),
        "emb_ln_b": jnp.zeros((H,), jnp.float32),
        "layers": [],
    }
    for l in range(num_layers):
        ks = jax.random.split(keys[l], 6)
        wq, bq = lin(ks[0], H, H)
        wk, bk = lin(ks[1], H, H)
        wv, bv = lin(ks[2], H, H)
        wo, bo = lin(ks[3], H, H)
        wi, bi = lin(ks[4], H, I)
        wd, bd = lin(ks[5], I, H)

        # Fold 1/sqrt(head_dim) into the query projection (done once on host).
        wq = wq * scale
        bq = bq * scale
        # HEAD-MAJOR fused QKV: columns [q_h | k_h | v_h] per head so each head's
        # q/k/v are one contiguous 3*d-wide lane range of the (S, 3H) block.
        wqkv_cols, bqkv_cols = [], []
        for h in range(num_heads):
            sl = slice(h * d, (h + 1) * d)
            wqkv_cols += [wq[:, sl], wk[:, sl], wv[:, sl]]
            bqkv_cols += [bq[sl], bk[sl], bv[sl]]

        params["layers"].append(dict(
            # Matmul weights are stored in bf16 (MXU operand dtype); biases and
            # LayerNorm parameters stay f32.
            wqkv=jnp.concatenate(wqkv_cols, axis=1).astype(jnp.bfloat16),
            bqkv=jnp.concatenate(bqkv_cols, axis=0),
            wo=wo.astype(jnp.bfloat16), bo=bo,
            wi=wi.astype(jnp.bfloat16), bi=bi,
            wd=wd.astype(jnp.bfloat16), bd=bd,
            ln1_g=jnp.ones((H,), jnp.float32), ln1_b=jnp.zeros((H,), jnp.float32),
            ln2_g=jnp.ones((H,), jnp.float32), ln2_b=jnp.zeros((H,), jnp.float32),
        ))
    return params


def transformer_forward(params, hidden_states):
    """Matches Transformer.forward(hidden_states) with token_type_ids=None,
    attention_mask=None, output_all_encoded_layers=False (dropout = identity).
    Returns a 1-element list like the PyTorch module."""
    B, S, H = hidden_states.shape
    nh = params["num_heads"]
    d = H // nh

    B_pad, tm = _plan_rows(B, S, _target_rows())
    x3 = hidden_states.astype(jnp.bfloat16)
    if B_pad != B:                     # pad whole batch rows; sliced off at the end
        x3 = jnp.pad(x3, ((0, B_pad - B), (0, 0), (0, 0)))
    M = B_pad * S
    x = x3.reshape(M, H)

    num_layers = len(params["layers"])
    for li, lp in enumerate(params["layers"]):
        if li == 0:
            # BertEmbeddings LayerNorm fused as a prologue of the first fused
            # QKV projection (second output = normalized x for the residual).
            qkv, x = ln_linear(x, params["emb_ln_g"], params["emb_ln_b"],
                               lp["wqkv"], lp["bqkv"], tm=tm)
        else:
            qkv = linear(x, lp["wqkv"], lp["bqkv"], tm=tm)

        # MultiHeadedAttention (self-attention, no mask). Free reshape only.
        ctx = attention(qkv.reshape(B_pad, S, 3 * H), num_heads=nh, head_dim=d)
        ctx = ctx.reshape(M, H)

        # BertSelfOutput: dense + residual + LayerNorm  (K = H)
        attn_out = linear_res_ln(ctx, lp["wo"], lp["bo"], x,
                                 lp["ln1_g"], lp["ln1_b"], tm=tm)
        # BertIntermediate: dense + exact-erf GELU
        inter = linear(attn_out, lp["wi"], lp["bi"], tm=tm, act="gelu")
        # BertOutput: dense + residual + LayerNorm  (K = 4H, K-tiled)
        last = li == num_layers - 1
        x = linear_res_ln(inter, lp["wd"], lp["bd"], attn_out,
                          lp["ln2_g"], lp["ln2_b"], tm=tm,
                          out_dtype=jnp.float32 if last else jnp.bfloat16)

    out = x.reshape(B_pad, S, H)[:B]
    return [out]


# ------------------------------- main ----------------------------------------------
if __name__ == "__main__":
    B, S, H, NH = 2, 8, 32, 4   # hidden_size=32, num_attention_heads=4 -> head_dim=8
    key = jax.random.PRNGKey(0)
    k_params, k_x = jax.random.split(key)
    params = init_params(k_params, H, NH, intermediate_factor=4, num_layers=2)
    hidden_states = jax.random.normal(k_x, (B, S, H), jnp.float32)

    out = transformer_forward(params, hidden_states)
    jax.block_until_ready(out)
    assert out[0].shape == (B, S, H)
    assert bool(jnp.all(jnp.isfinite(out[0])))
    print("KERNEL_OK")
</pallas_src>

<mosaic_0001>
module attributes {stable_mosaic.version = 11 : i64} {
  func.func @_ln_linear_kernel(%arg0: i32, %arg1: i32, %arg2: memref<16x32xbf16, #tpu.memory_space<vmem>>, %arg3: memref<1x32xf32, #tpu.memory_space<vmem>>, %arg4: memref<1x32xf32, #tpu.memory_space<vmem>>, %arg5: memref<32x96xbf16, #tpu.memory_space<vmem>>, %arg6: memref<1x96xf32, #tpu.memory_space<vmem>>, %arg7: memref<16x96xbf16, #tpu.memory_space<vmem>>, %arg8: memref<16x32xbf16, #tpu.memory_space<vmem>>, %arg9: memref<16x32xbf16, #tpu.memory_space<vmem>>) attributes {dimension_semantics = [#tpu.dimension_semantics<parallel>, #tpu.dimension_semantics<arbitrary>], iteration_bounds = array<i64: 1, 1>, scalar_prefetch = 0 : i64, scratch_operands = 1 : i64, tpu.core_type = #tpu.core_type<tc>, window_params = [{transform_indices = @transform_0, window_bounds = array<i64: 16, 32>}, {pipeline_mode = #tpu.pipeline_mode<synchronous>, transform_indices = @transform_1, window_bounds = array<i64: 1, 32>}, {pipeline_mode = #tpu.pipeline_mode<synchronous>, transform_indices = @transform_2, window_bounds = array<i64: 1, 32>}, {transform_indices = @transform_3, window_bounds = array<i64: 32, 96>}, {transform_indices = @transform_4, window_bounds = array<i64: 1, 96>}, {transform_indices = @transform_5, window_bounds = array<i64: 16, 96>}, {transform_indices = @transform_6, window_bounds = array<i64: 16, 32>}]} {
    %c0_i32 = arith.constant 0 : i32
    %0 = arith.cmpi eq, %arg1, %c0_i32 : i32
    %1 = arith.extui %0 : i1 to i32
    %c0_i32_0 = arith.constant 0 : i32
    %2 = arith.cmpi ne, %1, %c0_i32_0 : i32
    scf.if %2 {
      %c0_8 = arith.constant 0 : index
      %c0_9 = arith.constant 0 : index
      %11 = vector.load %arg2[%c0_8, %c0_9] : memref<16x32xbf16, #tpu.memory_space<vmem>>, vector<16x32xbf16>
      %12 = arith.extf %11 : vector<16x32xbf16> to vector<16x32xf32>
      %cst_10 = arith.constant dense<0.000000e+00> : vector<16xf32>
      %13 = vector.multi_reduction <add>, %12, %cst_10 [1] : vector<16x32xf32> to vector<16xf32>
      %14 = vector.shape_cast %13 : vector<16xf32> to vector<16x1xf32>
      %cst_11 = arith.constant 3.200000e+01 : f32
      %15 = vector.broadcast %cst_11 : f32 to vector<16x1xf32>
      %16 = arith.divf %14, %15 : vector<16x1xf32>
      %17 = vector.broadcast %16 : vector<16x1xf32> to vector<16x32xf32>
      %18 = arith.subf %12, %17 : vector<16x32xf32>
      %19 = arith.mulf %18, %18 : vector<16x32xf32>
      %cst_12 = arith.constant dense<0.000000e+00> : vector<16xf32>
      %20 = vector.multi_reduction <add>, %19, %cst_12 [1] : vector<16x32xf32> to vector<16xf32>
      %21 = vector.shape_cast %20 : vector<16xf32> to vector<16x1xf32>
      %cst_13 = arith.constant 3.200000e+01 : f32
      %22 = vector.broadcast %cst_13 : f32 to vector<16x1xf32>
      %23 = arith.divf %21, %22 : vector<16x1xf32>
      %c0_14 = arith.constant 0 : index
      %c0_15 = arith.constant 0 : index
      %24 = vector.load %arg3[%c0_14, %c0_15] : memref<1x32xf32, #tpu.memory_space<vmem>>, vector<1x32xf32>
      %cst_16 = arith.constant 9.99999996E-13 : f32
      %25 = vector.broadcast %cst_16 : f32 to vector<16x1xf32>
      %26 = arith.addf %23, %25 : vector<16x1xf32>
      %27 = math.rsqrt %26 : vector<16x1xf32>
      %28 = vector.broadcast %27 : vector<16x1xf32> to vector<16x32xf32>
      %29 = arith.mulf %18, %28 : vector<16x32xf32>
      %30 = vector.broadcast %24 : vector<1x32xf32> to vector<16x32xf32>
      %31 = arith.mulf %30, %29 : vector<16x32xf32>
      %c0_17 = arith.constant 0 : index
      %c0_18 = arith.constant 0 : index
      %32 = vector.load %arg4[%c0_17, %c0_18] : memref<1x32xf32, #tpu.memory_space<vmem>>, vector<1x32xf32>
      %33 = vector.broadcast %32 : vector<1x32xf32> to vector<16x32xf32>
      %34 = arith.addf %31, %33 : vector<16x32xf32>
      %35 = arith.truncf %34 : vector<16x32xf32> to vector<16x32xbf16>
      %c0_19 = arith.constant 0 : index
      %c0_20 = arith.constant 0 : index
      %36 = vector.load %arg9[%c0_19, %c0_20] : memref<16x32xbf16, #tpu.memory_space<vmem>>, vector<16x32xbf16>
      tpu.vector_store %arg9[%c0_19, %c0_20], %35 {strides = array<i32>} : memref<16x32xbf16, #tpu.memory_space<vmem>>, vector<16x32xbf16>,
      %c0_21 = arith.constant 0 : index
      %c0_22 = arith.constant 0 : index
      %37 = vector.load %arg8[%c0_21, %c0_22] : memref<16x32xbf16, #tpu.memory_space<vmem>>, vector<16x32xbf16>
      tpu.vector_store %arg8[%c0_21, %c0_22], %35 {strides = array<i32>} : memref<16x32xbf16, #tpu.memory_space<vmem>>, vector<16x32xbf16>,
    } else {
    }
    %c0 = arith.constant 0 : index
    %c0_1 = arith.constant 0 : index
    %3 = vector.load %arg9[%c0, %c0_1] : memref<16x32xbf16, #tpu.memory_space<vmem>>, vector<16x32xbf16>
    %c0_2 = arith.constant 0 : index
    %c0_3 = arith.constant 0 : index
    %4 = vector.load %arg5[%c0_2, %c0_3] : memref<32x96xbf16, #tpu.memory_space<vmem>>, vector<32x96xbf16>
    %cst = arith.constant dense<0.000000e+00> : vector<16x96xf32>
    %5 = tpu.matmul %3, %4, %cst {dimension_numbers = #tpu.dot_dimension_numbers<[1], [0], [0], [1], [0, 0, 1, 1], [], []>} : vector<16x32xbf16>, vector<32x96xbf16>, vector<16x96xf32> -> vector<16x96xf32>
    %c0_4 = arith.constant 0 : index
    %c0_5 = arith.constant 0 : index
    %6 = vector.load %arg6[%c0_4, %c0_5] : memref<1x96xf32, #tpu.memory_space<vmem>>, vector<1x96xf32>
    %7 = vector.broadcast %6 : vector<1x96xf32> to vector<16x96xf32>
    %8 = arith.addf %5, %7 : vector<16x96xf32>
    %9 = arith.truncf %8 : vector<16x96xf32> to vector<16x96xbf16>
    %c0_6 = arith.constant 0 : index
    %c0_7 = arith.constant 0 : index
    %10 = vector.load %arg7[%c0_6, %c0_7] : memref<16x96xbf16, #tpu.memory_space<vmem>>, vector<16x96xbf16>
    tpu.vector_store %arg7[%c0_6, %c0_7], %9 {strides = array<i32>} : memref<16x96xbf16, #tpu.memory_space<vmem>>, vector<16x96xbf16>,
    return
  }
  func.func @transform_0(%arg0: i32, %arg1: i32) -> (i32, i32) {
    %c0_i32 = arith.constant 0 : i32
    %c0_i32_0 = arith.constant 0 : i32
    return %arg0, %c0_i32 : i32, i32
  }
  func.func @transform_1(%arg0: i32, %arg1: i32) -> (i32, i32) {
    %c0_i32 = arith.constant 0 : i32
    %c0_i32_0 = arith.constant 0 : i32
    %c0_i32_1 = arith.constant 0 : i32
    return %c0_i32, %c0_i32_0 : i32, i32
  }
  func.func @transform_2(%arg0: i32, %arg1: i32) -> (i32, i32) {
    %c0_i32 = arith.constant 0 : i32
    %c0_i32_0 = arith.constant 0 : i32
    %c0_i32_1 = arith.constant 0 : i32
    return %c0_i32, %c0_i32_0 : i32, i32
  }
  func.func @transform_3(%arg0: i32, %arg1: i32) -> (i32, i32) {
    %c0_i32 = arith.constant 0 : i32
    %c0_i32_0 = arith.constant 0 : i32
    return %c0_i32, %arg1 : i32, i32
  }
  func.func @transform_4(%arg0: i32, %arg1: i32) -> (i32, i32) {
    %c0_i32 = arith.constant 0 : i32
    %c0_i32_0 = arith.constant 0 : i32
    return %c0_i32, %arg1 : i32, i32
  }
  func.func @transform_5(%arg0: i32, %arg1: i32) -> (i32, i32) {
    %c0_i32 = arith.constant 0 : i32
    return %arg0, %arg1 : i32, i32
  }
  func.func @transform_6(%arg0: i32, %arg1: i32) -> (i32, i32) {
    %c0_i32 = arith.constant 0 : i32
    %c0_i32_0 = arith.constant 0 : i32
    return %arg0, %c0_i32 : i32, i32
  }
}

</mosaic_0001>

<llo_original>
// kernel: tpu_custom_call.1
$region0: #{tpu_custom_call.1}
  #allocation0 [shape = 'u32[]', space=smem, size = 0x4, offset = 0x4, fixed_abs, tag = 'smem constant byte address 0x4 - core index']
  #allocation1 [shape = 'u32[72,128]{1,0:T(1,128)}', space=vmem, size = 0x9000, scoped, tag = 'internal scratch']
  #allocation2 [shape = 'bf16[16,32]{1,0:T(8,128)(2,1)}', space=vmem, size = 0x1000, scoped, tag = 'scratch operand']
  %s0 = inlined_call_operand.hbm [shape: bf16[16,32], index: 0, kind: input, shape index: {}]
  %s1 = inlined_call_operand.hbm [shape: f32[1,32], index: 1, kind: input, shape index: {}]
  %s2 = inlined_call_operand.vmem [shape: f32[1,32], index: 2, kind: input, shape index: {}]
  %s3 = inlined_call_operand.hbm [shape: bf16[32,96], index: 3, kind: input, shape index: {}]
  %s4 = inlined_call_operand.vmem [shape: f32[1,96], index: 4, kind: input, shape index: {}]
  %s5 = inlined_call_operand.hbm [shape: bf16[16,96], index: 5, kind: output, shape index: {0}]
  %s6 = inlined_call_operand.hbm [shape: bf16[16,32], index: 6, kind: output, shape index: {1}]
  %7 = xla_tuple %s5, %s6
  %s8 = sld [smem:[#allocation0]]
  $region54: #{tpu_custom_call.1} parent=0
    _
  %s10 = ssub.s32 1, %s8
  %s11 = scalar_select 0, %s10, %s8
  $region1: #{tpu_custom_call.1} parent=0
    #allocation3 [shape = 'u8[4096]{0}', space=vmem, size = 0x1000, scoped, tag = 'input window, operand 0, single buffered']
    #allocation4 [shape = 's32[1]{0}', space=sflag, size = 0x4, scoped, tag = 'scoped memory for tpu_custom_call.1']
    #allocation5 [shape = 's32[1]{0}', space=sflag, size = 0x4, scoped, tag = 'scoped memory for tpu_custom_call.1']
    #allocation6 [shape = 'u8[512]{0}', space=vmem, size = 0x400, scoped, tag = 'input window, operand 1, single buffered']
    #allocation7 [shape = 's32[1]{0}', space=sflag, size = 0x4, scoped, tag = 'scoped memory for tpu_custom_call.1']
    #allocation8 [shape = 'u8[8192]{0}', space=vmem, size = 0x2000, scoped, tag = 'input window, operand 3, single buffered']
    #allocation9 [shape = 'u8[4096]{0}', space=vmem, size = 0x1000, scoped, tag = 'output window, operand 0, single buffered']
    #allocation10 [shape = 'u8[4096]{0}', space=vmem, size = 0x1000, scoped, tag = 'output window, operand 1, single buffered']
    #allocation11 [shape = 's32[1]{0}', space=sflag, size = 0x4, scoped, tag = 'scoped memory for tpu_custom_call.1']
    %12 = vsyncpa [#allocation4], 0
    %13 = vsyncpa [#allocation7], 0
    %14 = vsyncpa [#allocation5], 0
    %15 = vsyncpa [#allocation11], 0
    // Predicated region
    $region2: #{tpu_custom_call.1} parent=1 // pred_check
      _
    $region3: #{tpu_custom_call.1} parent=1 // pred_check_branch
      %17 = sbr.rel (0) target = $region5
    $region4: #{tpu_custom_call.1} parent=1 // pred_region
      %19 = vsyncadd [#allocation4], 0
      %s20 = sshll.u32 %s0, 4
      %s21 = int_to_ptr.hbm [resolvable:$true] %s20
      %s22 = sshll.u32 [#allocation3], 4
      %s23 = int_to_ptr.vmem [resolvable:$true] %s22
      %28 = dma.hbm_to_vmem [thread:$0]  %s21, 128, %s23, [#allocation4], 64, 64, 4
    $region5: #{tpu_custom_call.1} parent=1 // pred_fallthru
      _
    // Predicated region
    $region6: #{tpu_custom_call.1} parent=1 // pred_check
      _
    $region7: #{tpu_custom_call.1} parent=1 // pred_check_branch
      %30 = sbr.rel (0) target = $region9
    $region8: #{tpu_custom_call.1} parent=1 // pred_region
      %32 = vsyncadd [#allocation7], 0
      %s34 = sshll.u32 %s1, 4
      %s35 = int_to_ptr.hbm [resolvable:$true] %s34
      %s36 = sshll.u32 [#allocation6], 4
      %s37 = int_to_ptr.vmem [resolvable:$true] %s36
      %39 = dma.hbm_to_vmem [thread:$0]  %s35, 16, %s37, [#allocation7]
    $region9: #{tpu_custom_call.1} parent=1 // pred_fallthru
      _
    // Predicated region
    $region10: #{tpu_custom_call.1} parent=1 // pred_check
      _
    $region11: #{tpu_custom_call.1} parent=1 // pred_check_branch
      %41 = sbr.rel (0) target = $region13
    $region12: #{tpu_custom_call.1} parent=1 // pred_region
      _
    $region13: #{tpu_custom_call.1} parent=1 // pred_fallthru
      _
    // Predicated region
    $region14: #{tpu_custom_call.1} parent=1 // pred_check
      _
    $region15: #{tpu_custom_call.1} parent=1 // pred_check_branch
      %43 = sbr.rel (0) target = $region17
    $region16: #{tpu_custom_call.1} parent=1 // pred_region
      %45 = vsyncadd [#allocation7], 0
      %s46 = sshll.u32 %s3, 4
      %s47 = int_to_ptr.hbm [resolvable:$true] %s46
      %s48 = sshll.u32 [#allocation8], 4
      %s49 = int_to_ptr.vmem [resolvable:$true] %s48
      %54 = dma.hbm_to_vmem [thread:$0]  %s47, 256, %s49, [#allocation7], 64, 64, 4
    $region17: #{tpu_custom_call.1} parent=1 // pred_fallthru
      _
    // Predicated region
    $region18: #{tpu_custom_call.1} parent=1 // pred_check
      _
    $region19: #{tpu_custom_call.1} parent=1 // pred_check_branch
      %56 = sbr.rel (0) target = $region21
    $region20: #{tpu_custom_call.1} parent=1 // pred_region
      _
    $region21: #{tpu_custom_call.1} parent=1 // pred_fallthru
      _
    // Predicated region
    $region22: #{tpu_custom_call.1} parent=1 // pred_check
      _
    $region23: #{tpu_custom_call.1} parent=1 // pred_check_branch
      %58 = sbr.rel (0) target = $region25
    $region24: #{tpu_custom_call.1} parent=1 // pred_region
      %60 = dma.done [#allocation4], 128
    $region25: #{tpu_custom_call.1} parent=1 // pred_fallthru
      _
    // Predicated region
    $region26: #{tpu_custom_call.1} parent=1 // pred_check
      _
    $region27: #{tpu_custom_call.1} parent=1 // pred_check_branch
      %62 = sbr.rel (0) target = $region29
    $region28: #{tpu_custom_call.1} parent=1 // pred_region
      %64 = dma.done [#allocation7], 16
    $region29: #{tpu_custom_call.1} parent=1 // pred_fallthru
      _
    // Predicated region
    $region30: #{tpu_custom_call.1} parent=1 // pred_check
      _
    $region31: #{tpu_custom_call.1} parent=1 // pred_check_branch
      %66 = sbr.rel (0) target = $region33
    $region32: #{tpu_custom_call.1} parent=1 // pred_region
      %68 = dma.done [#allocation7], 256
    $region33: #{tpu_custom_call.1} parent=1 // pred_fallthru
      _
    %p70 = scmp.eq.s32.totalorder 0, 0
    // Predicated region
    $region34: #{tpu_custom_call.1} parent=1 // pred_check
      %p71 = pneg %p70
    $region35: #{tpu_custom_call.1} parent=1 // pred_check_branch
      %73 = sbr.rel (%p71) target = $region37
    $region36: #{tpu_custom_call.1} parent=1 // pred_region
      %v74 = vld [vmem:[#allocation3] sm:$0xf]
      %v75 = vld [vmem:[#allocation3 + $0x4] sm:$0xf]
      %v76 = vunpack.c.l.bf16 %v74
      %v77 = vunpack.c.l.bf16 %v75
      %vm78 = vcmask 261120
      %v79 = vsel %vm78, %v76, 0.0
      %80 = vadd.xlane.f32.xlu0 %v79
      %v81 = vpop.xlane.xlu0 %80
      %v82 = vsel %vm78, %v77, 0.0
      %83 = vadd.xlane.f32.xlu0 %v82
      %v84 = vpop.xlane.xlu0 %83
      %v85 = vrcp.pop 32.0
      %v86 = vmul.f32 32.0, %v85
      %v87 = vsub.f32 1.0, %v86
      %v88 = vmul.f32 %v85, %v87
      %v89 = vadd.f32 %v85, %v88
      %vm90 = vweird.f32 %v85
      %v91 = vsel %vm90, %v85, %v89
      %v92 = vmul.f32 %v81, %v91
      %v93 = vmul.f32 %v84, %v91
      %v94 = vsub.f32 %v76, %v92
      %v95 = vsub.f32 %v77, %v93
      %v96 = vmul.f32 %v94, %v94
      %v97 = vmul.f32 %v95, %v95
      %v98 = vsel %vm78, %v96, 0.0
      %99 = vadd.xlane.f32.xlu0 %v98
      %v100 = vpop.xlane.xlu0 %99
      %v101 = vsel %vm78, %v97, 0.0
      %102 = vadd.xlane.f32.xlu0 %v101
      %v103 = vpop.xlane.xlu0 %102
      %v104 = vmul.f32 %v100, %v91
      %v105 = vmul.f32 %v103, %v91
      %v106 = vld [vmem:[#allocation6] sm:$0x1]
      %v107 = vadd.f32 %v104, 1e-12
      %v108 = vadd.f32 %v105, 1e-12
      %v109 = vrsqrt.pop %v107
      %v110 = vmul.f32 %v109, %v107
      %v111 = vmul.f32 %v110, %v109
      %v112 = vmul.f32 0.5, %v111
      %v113 = vsub.f32 1.5, %v112
      %v114 = vmul.f32 %v109, %v113
      %vm115 = vweird.f32 %v107
      %vm116 = vweird.f32 %v109
      %vm117 = vmor %vm115, %vm116
      %v118 = vsel %vm117, %v109, %v114
      %v119 = vrsqrt.pop %v108
      %v120 = vmul.f32 %v119, %v108
      %v121 = vmul.f32 %v120, %v119
      %v122 = vmul.f32 0.5, %v121
      %v123 = vsub.f32 1.5, %v122
      %v124 = vmul.f32 %v119, %v123
      %vm125 = vweird.f32 %v108
      %vm126 = vweird.f32 %v119
      %vm127 = vmor %vm125, %vm126
      %v128 = vsel %vm127, %v119, %v124
      %v129 = vmul.f32 %v94, %v118
      %v130 = vmul.f32 %v95, %v128
      %v132 = vperm.slane %v106, 0
      %v134 = vmul.f32 %v132, %v129
      %v135 = vmul.f32 %v132, %v130
      %v136 = vld [vmem:[%s2] sm:$0x1]
      %v138 = vperm.slane %v136, 0
      %v140 = vadd.f32 %v134, %v138
      %v141 = vadd.f32 %v135, %v138
      %v142 = vpack.c.bf16 %v140, %v140
      %v143 = vpack.c.bf16 %v141, %v141
      %vm144 = vcmask 257024
      %145 = vst.msk [vmem:[#allocation2] sm:$0xf] %vm144, %v142
      %146 = vst.msk [vmem:[#allocation2 + $0x4] sm:$0xf] %vm144, %v143
      %147 = vst.msk [vmem:[#allocation10] sm:$0xf] %vm144, %v142
      %148 = vst.msk [vmem:[#allocation10 + $0x4] sm:$0xf] %vm144, %v143
    $region37: #{tpu_custom_call.1} parent=1 // pred_fallthru
      _
    %v149 = vld [vmem:[#allocation2] sm:$0xf]
    %v150 = vld [vmem:[#allocation2 + $0x4] sm:$0xf]
    %v151 = vld [vmem:[#allocation8] sm:$0xf]
    %v152 = vld [vmem:[#allocation8 + $0x4] sm:$0xf]
    %v153 = vld [vmem:[#allocation8 + $0x8] sm:$0xf]
    %v154 = vld [vmem:[#allocation8 + $0xc] sm:$0xf]
    %v155 = vld [vmem:[%s4] sm:$0x1]
    %v157 = vperm.slane %v155, 0
    %v161 = vunpack.c.l.b16 %v149
    %v162 = vunpack.c.l.b16 %v150
    %v163 = vpack.c.b16 %v162, %v161
    %v168 = vunpack.c.l.b16 %v151
    %v169 = vunpack.c.l.b16 %v152
    %v170 = vunpack.c.l.b16 %v153
    %v171 = vunpack.c.l.b16 %v154
    %v172 = vpack.c.b16 %v169, %v168
    %v173 = vpack.c.b16 %v171, %v170
    %vm176 = vcmask 261120
    %v178 = vsel %vm176, %v163, 0
    %180 = vmatpush.bf16.msra.mxu0 0
    %181 = vmatpush.bf16.msra.mxu0 0
    %182 = vmatpush.bf16.msra.mxu0 0
    %183 = vmatpush.bf16.msra.mxu0 0
    %184 = vmatpush.bf16.msra.mxu0 0
    %185 = vmatpush.bf16.msra.mxu0 0
    %186 = vmatpush.bf16.msra.mxu0 %v173
    %187 = vmatpush.bf16.msra.mxu0 %v172
    %188 = vmatmul.bf16.gmra.mxu0 %v178
    %v189 = vpop.f32.mrf.mxu0
    %v190 = vadd.f32 %v157, %v189
    %v191 = vpop.f32.mrf.mxu0
    %v192 = vadd.f32 %v157, %v191
    %193 = vdwg.mxu0
    %v194 = vpack.c.bf16 %v190, %v190
    %v195 = vpack.c.bf16 %v192, %v192
    %vm196 = vcmask 781312
    %197 = vst.msk [vmem:[#allocation9] sm:$0xf] %vm196, %v194
    %198 = vst.msk [vmem:[#allocation9 + $0x4] sm:$0xf] %vm196, %v195
    // Predicated region
    $region38: #{tpu_custom_call.1} parent=1 // pred_check
      _
    $region39: #{tpu_custom_call.1} parent=1 // pred_check_branch
      %200 = sbr.rel (0) target = $region41
    $region40: #{tpu_custom_call.1} parent=1 // pred_region
      %202 = vsyncadd [#allocation5], 0
      %s203 = sshll.u32 [#allocation9], 4
      %s204 = int_to_ptr.vmem [resolvable:$true] %s203
      %s205 = sshll.u32 %s5, 4
      %s206 = int_to_ptr.hbm [resolvable:$true] %s205
      %211 = dma.vmem_to_hbm [thread:$0]  %s204, 128, %s206, [#allocation5], 64, 64, 4
    $region41: #{tpu_custom_call.1} parent=1 // pred_fallthru
      _
    // Predicated region
    $region42: #{tpu_custom_call.1} parent=1 // pred_check
      _
    $region43: #{tpu_custom_call.1} parent=1 // pred_check_branch
      %213 = sbr.rel (0) target = $region45
    $region44: #{tpu_custom_call.1} parent=1 // pred_region
      %215 = vsyncadd [#allocation11], 0
      %s216 = sshll.u32 [#allocation10], 4
      %s217 = int_to_ptr.vmem [resolvable:$true] %s216
      %s218 = sshll.u32 %s6, 4
      %s219 = int_to_ptr.hbm [resolvable:$true] %s218
      %224 = dma.vmem_to_hbm [thread:$0]  %s217, 128, %s219, [#allocation11], 64, 64, 4
    $region45: #{tpu_custom_call.1} parent=1 // pred_fallthru
      _
    // Predicated region
    $region46: #{tpu_custom_call.1} parent=1 // pred_check
      _
    $region47: #{tpu_custom_call.1} parent=1 // pred_check_branch
      %226 = sbr.rel (0) target = $region49
    $region48: #{tpu_custom_call.1} parent=1 // pred_region
      %228 = dma.done [#allocation5], 128
    $region49: #{tpu_custom_call.1} parent=1 // pred_fallthru
      _
    // Predicated region
    $region50: #{tpu_custom_call.1} parent=1 // pred_check
      _
    $region51: #{tpu_custom_call.1} parent=1 // pred_check_branch
      %230 = sbr.rel (0) target = $region53
    $region52: #{tpu_custom_call.1} parent=1 // pred_region
      %232 = dma.done [#allocation11], 128
    $region53: #{tpu_custom_call.1} parent=1 // pred_fallthru
      _
    %233 = vsyncpa [#allocation4], 1
    %234 = vsyncpa [#allocation7], 1
    %235 = vsyncpa [#allocation5], 1
    %236 = vsyncpa [#allocation11], 1

</llo_original>
